<compile_context>
chip_gen: v6e
topology: v6e:2x2x1
jax: 0.10.0
libtpu: 0.0.40
codegen_flags: <defaults>
</compile_context>

<pallas_src>
import functools

import jax
import jax.numpy as jnp
from jax.experimental import pallas as pl
from jax.experimental.pallas import tpu as pltpu


IN_FEATURES = 11
HIDDEN = 250
OUT_FEATURES = 3

# Padded (TPU-friendly) dims.
K_PAD = 16     # contraction dim of first matmul, multiple of 8
H_PAD = 256    # hidden dim, multiple of 128
N_PAD = 128    # output dim, full lane width -> unmasked stores


def _round_up(x, m):
    return ((x + m - 1) // m) * m


def _mlp_kernel(x_ref, w1_ref, b1_ref, w2_ref, b2_ref, o_ref):
    # (TB, 16) @ (16, 256) + (1, 256) -> ReLU -> @ (256, 128) + (1, 128)
    h = jnp.dot(x_ref[...], w1_ref[...], preferred_element_type=jnp.float32)
    h = jnp.maximum(h + b1_ref[...], 0.0)
    o_ref[...] = (
        jnp.dot(h, w2_ref[...], preferred_element_type=jnp.float32) + b2_ref[...]
    )


@functools.partial(jax.jit, static_argnames=("batch_tile",))
def neural_network_forward(x, w1, b1, w2, b2, *, batch_tile=1024):
    """Forward pass of Linear(11,250)->ReLU->Linear(250,3).

    x:  (B, 11) f32
    w1: (11, 250) f32   (already transposed from PyTorch's (250, 11))
    b1: (250,)   f32
    w2: (250, 3) f32    (already transposed from PyTorch's (3, 250))
    b2: (3,)     f32
    returns (B, 3) f32
    """
    B = x.shape[0]

    # Pick a batch tile: large enough to amortize per-step overhead, but no
    # larger than the (8-aligned) batch itself for tiny inputs.
    tb = min(batch_tile, _round_up(B, 8))
    b_pad = _round_up(B, tb)

    # Zero-pad everything to TPU-friendly shapes (zeros are inert).
    x_p = jnp.zeros((b_pad, K_PAD), jnp.float32).at[:B, :IN_FEATURES].set(x)
    w1_p = jnp.zeros((K_PAD, H_PAD), jnp.float32).at[:IN_FEATURES, :HIDDEN].set(w1)
    b1_p = jnp.zeros((1, H_PAD), jnp.float32).at[0, :HIDDEN].set(b1)
    w2_p = jnp.zeros((H_PAD, N_PAD), jnp.float32).at[:HIDDEN, :OUT_FEATURES].set(w2)
    b2_p = jnp.zeros((1, N_PAD), jnp.float32).at[0, :OUT_FEATURES].set(b2)

    grid = (b_pad // tb,)

    out_padded = pl.pallas_call(
        _mlp_kernel,
        out_shape=jax.ShapeDtypeStruct((b_pad, N_PAD), jnp.float32),
        grid=grid,
        in_specs=[
            pl.BlockSpec((tb, K_PAD), lambda i: (i, 0)),      # x: tiles over batch
            pl.BlockSpec((K_PAD, H_PAD), lambda i: (0, 0)),   # w1: VMEM-resident
            pl.BlockSpec((1, H_PAD), lambda i: (0, 0)),       # b1: VMEM-resident
            pl.BlockSpec((H_PAD, N_PAD), lambda i: (0, 0)),   # w2: VMEM-resident
            pl.BlockSpec((1, N_PAD), lambda i: (0, 0)),       # b2: VMEM-resident
        ],
        out_specs=pl.BlockSpec((tb, N_PAD), lambda i: (i, 0)),
        compiler_params=pltpu.CompilerParams(
            dimension_semantics=("parallel",),  # megacore sharding on v7x
        ),
    )(x_p, w1_p, b1_p, w2_p, b2_p)

    # Slice back to the true (B, 3) result.
    return out_padded[:B, :OUT_FEATURES]


def init_params(key):
    """Deterministic init mimicking nn.Linear's U(-1/sqrt(fan_in), 1/sqrt(fan_in))."""
    k1, k2, k3, k4 = jax.random.split(key, 4)
    bound1 = 1.0 / jnp.sqrt(IN_FEATURES)
    bound2 = 1.0 / jnp.sqrt(HIDDEN)
    # Stored directly in (in, out) layout (PyTorch weight transposed).
    w1 = jax.random.uniform(k1, (IN_FEATURES, HIDDEN), jnp.float32, -bound1, bound1)
    b1 = jax.random.uniform(k2, (HIDDEN,), jnp.float32, -bound1, bound1)
    w2 = jax.random.uniform(k3, (HIDDEN, OUT_FEATURES), jnp.float32, -bound2, bound2)
    b2 = jax.random.uniform(k4, (OUT_FEATURES,), jnp.float32, -bound2, bound2)
    return w1, b1, w2, b2


if __name__ == "__main__":
    key = jax.random.PRNGKey(0)
    k_params, k_x = jax.random.split(key)
    w1, b1, w2, b2 = init_params(k_params)

    B = 8
    x = jax.random.normal(k_x, (B, IN_FEATURES), jnp.float32)

    out = neural_network_forward(x, w1, b1, w2, b2)
    out = jax.block_until_ready(out)

    # Reference check in plain JAX (same math as PyTorch forward).
    ref = jnp.maximum(x @ w1 + b1, 0.0) @ w2 + b2
    assert out.shape == (B, OUT_FEATURES)
    assert jnp.allclose(out, ref, atol=1e-5, rtol=1e-5)

    # Also exercise a batch that is not a multiple of the tile (ragged path).
    B2 = 37
    x2 = jax.random.normal(jax.random.PRNGKey(1), (B2, IN_FEATURES), jnp.float32)
    out2 = jax.block_until_ready(neural_network_forward(x2, w1, b1, w2, b2))
    ref2 = jnp.maximum(x2 @ w1 + b1, 0.0) @ w2 + b2
    assert out2.shape == (B2, OUT_FEATURES)
    assert jnp.allclose(out2, ref2, atol=1e-5, rtol=1e-5)

    print("KERNEL_OK")
</pallas_src>

<mosaic_0001>
module attributes {stable_mosaic.version = 11 : i64} {
  func.func @_mlp_kernel(%arg0: i32, %arg1: memref<8x16xf32, #tpu.memory_space<vmem>>, %arg2: memref<16x256xf32, #tpu.memory_space<vmem>>, %arg3: memref<1x256xf32, #tpu.memory_space<vmem>>, %arg4: memref<256x128xf32, #tpu.memory_space<vmem>>, %arg5: memref<1x128xf32, #tpu.memory_space<vmem>>, %arg6: memref<8x128xf32, #tpu.memory_space<vmem>>) attributes {dimension_semantics = [#tpu.dimension_semantics<parallel>], iteration_bounds = array<i64: 1>, scalar_prefetch = 0 : i64, scratch_operands = 0 : i64, tpu.core_type = #tpu.core_type<tc>, window_params = [{transform_indices = @transform_0, window_bounds = array<i64: 8, 16>}, {pipeline_mode = #tpu.pipeline_mode<synchronous>, transform_indices = @transform_1, window_bounds = array<i64: 16, 256>}, {pipeline_mode = #tpu.pipeline_mode<synchronous>, transform_indices = @transform_2, window_bounds = array<i64: 1, 256>}, {pipeline_mode = #tpu.pipeline_mode<synchronous>, transform_indices = @transform_3, window_bounds = array<i64: 256, 128>}, {pipeline_mode = #tpu.pipeline_mode<synchronous>, transform_indices = @transform_4, window_bounds = array<i64: 1, 128>}, {transform_indices = @transform_5, window_bounds = array<i64: 8, 128>}]} {
    %c0 = arith.constant 0 : index
    %c0_0 = arith.constant 0 : index
    %0 = vector.load %arg1[%c0, %c0_0] : memref<8x16xf32, #tpu.memory_space<vmem>>, vector<8x16xf32>
    %c0_1 = arith.constant 0 : index
    %c0_2 = arith.constant 0 : index
    %1 = vector.load %arg2[%c0_1, %c0_2] : memref<16x256xf32, #tpu.memory_space<vmem>>, vector<16x256xf32>
    %cst = arith.constant dense<0.000000e+00> : vector<8x256xf32>
    %2 = tpu.matmul %0, %1, %cst {dimension_numbers = #tpu.dot_dimension_numbers<[1], [0], [0], [1], [0, 0, 1, 1], [], []>} : vector<8x16xf32>, vector<16x256xf32>, vector<8x256xf32> -> vector<8x256xf32>
    %c0_3 = arith.constant 0 : index
    %c0_4 = arith.constant 0 : index
    %3 = vector.load %arg3[%c0_3, %c0_4] : memref<1x256xf32, #tpu.memory_space<vmem>>, vector<1x256xf32>
    %4 = vector.broadcast %3 : vector<1x256xf32> to vector<8x256xf32>
    %5 = arith.addf %2, %4 : vector<8x256xf32>
    %cst_5 = arith.constant 0.000000e+00 : f32
    %6 = vector.broadcast %cst_5 : f32 to vector<8x256xf32>
    %7 = arith.maximumf %5, %6 : vector<8x256xf32>
    %c0_6 = arith.constant 0 : index
    %c0_7 = arith.constant 0 : index
    %8 = vector.load %arg4[%c0_6, %c0_7] : memref<256x128xf32, #tpu.memory_space<vmem>>, vector<256x128xf32>
    %cst_8 = arith.constant dense<0.000000e+00> : vector<8x128xf32>
    %9 = tpu.matmul %7, %8, %cst_8 {dimension_numbers = #tpu.dot_dimension_numbers<[1], [0], [0], [1], [0, 0, 1, 1], [], []>} : vector<8x256xf32>, vector<256x128xf32>, vector<8x128xf32> -> vector<8x128xf32>
    %c0_9 = arith.constant 0 : index
    %c0_10 = arith.constant 0 : index
    %10 = vector.load %arg5[%c0_9, %c0_10] : memref<1x128xf32, #tpu.memory_space<vmem>>, vector<1x128xf32>
    %11 = vector.broadcast %10 : vector<1x128xf32> to vector<8x128xf32>
    %12 = arith.addf %9, %11 : vector<8x128xf32>
    %c0_11 = arith.constant 0 : index
    %c0_12 = arith.constant 0 : index
    %13 = vector.load %arg6[%c0_11, %c0_12] : memref<8x128xf32, #tpu.memory_space<vmem>>, vector<8x128xf32>
    tpu.vector_store %arg6[%c0_11, %c0_12], %12 {strides = array<i32>} : memref<8x128xf32, #tpu.memory_space<vmem>>, vector<8x128xf32>,
    return
  }
  func.func @transform_0(%arg0: i32) -> (i32, i32) {
    %c0_i32 = arith.constant 0 : i32
    %c0_i32_0 = arith.constant 0 : i32
    return %arg0, %c0_i32 : i32, i32
  }
  func.func @transform_1(%arg0: i32) -> (i32, i32) {
    %c0_i32 = arith.constant 0 : i32
    %c0_i32_0 = arith.constant 0 : i32
    %c0_i32_1 = arith.constant 0 : i32
    return %c0_i32, %c0_i32_0 : i32, i32
  }
  func.func @transform_2(%arg0: i32) -> (i32, i32) {
    %c0_i32 = arith.constant 0 : i32
    %c0_i32_0 = arith.constant 0 : i32
    %c0_i32_1 = arith.constant 0 : i32
    return %c0_i32, %c0_i32_0 : i32, i32
  }
  func.func @transform_3(%arg0: i32) -> (i32, i32) {
    %c0_i32 = arith.constant 0 : i32
    %c0_i32_0 = arith.constant 0 : i32
    %c0_i32_1 = arith.constant 0 : i32
    return %c0_i32, %c0_i32_0 : i32, i32
  }
  func.func @transform_4(%arg0: i32) -> (i32, i32) {
    %c0_i32 = arith.constant 0 : i32
    %c0_i32_0 = arith.constant 0 : i32
    %c0_i32_1 = arith.constant 0 : i32
    return %c0_i32, %c0_i32_0 : i32, i32
  }
  func.func @transform_5(%arg0: i32) -> (i32, i32) {
    %c0_i32 = arith.constant 0 : i32
    %c0_i32_0 = arith.constant 0 : i32
    return %arg0, %c0_i32 : i32, i32
  }
}

</mosaic_0001>

<llo_original>
// kernel: neural_network_forward.1
$region0: #{neural_network_forward.1}
  #allocation0 [shape = 'u32[]', space=smem, size = 0x4, offset = 0x4, fixed_abs, tag = 'smem constant byte address 0x4 - core index']
  #allocation1 [shape = 'u32[144,128]{1,0:T(1,128)}', space=vmem, size = 0x12000, scoped, tag = 'internal scratch']
  %s0 = inlined_call_operand.vmem [shape: f32[8,16], index: 0, kind: input, shape index: {}]
  %s1 = inlined_call_operand.vmem [shape: f32[16,256], index: 1, kind: input, shape index: {}]
  %s2 = inlined_call_operand.vmem [shape: f32[1,256], index: 2, kind: input, shape index: {}]
  %s3 = inlined_call_operand.vmem [shape: f32[256,128], index: 3, kind: input, shape index: {}]
  %s4 = inlined_call_operand.vmem [shape: f32[1,128], index: 4, kind: input, shape index: {}]
  %s5 = inlined_call_operand.vmem [shape: f32[8,128], index: 5, kind: output, shape index: {}]
  %s6 = sld [smem:[#allocation0]]
  $region30: #{neural_network_forward.1} parent=0
    _
  %s8 = ssub.s32 1, %s6
  %s9 = scalar_select 0, %s8, %s6
  // Predicated region
  $region2: #{neural_network_forward.1} parent=0 // pred_check
    _
  $region3: #{neural_network_forward.1} parent=0 // pred_check_branch
    %11 = sbr.rel (0) target = $region5
  $region4: #{neural_network_forward.1} parent=0 // pred_region
    _
  $region5: #{neural_network_forward.1} parent=0 // pred_fallthru
    _
  // Predicated region
  $region6: #{neural_network_forward.1} parent=0 // pred_check
    _
  $region7: #{neural_network_forward.1} parent=0 // pred_check_branch
    %13 = sbr.rel (0) target = $region9
  $region8: #{neural_network_forward.1} parent=0 // pred_region
    _
  $region9: #{neural_network_forward.1} parent=0 // pred_fallthru
    _
  // Predicated region
  $region10: #{neural_network_forward.1} parent=0 // pred_check
    _
  $region11: #{neural_network_forward.1} parent=0 // pred_check_branch
    %15 = sbr.rel (0) target = $region13
  $region12: #{neural_network_forward.1} parent=0 // pred_region
    _
  $region13: #{neural_network_forward.1} parent=0 // pred_fallthru
    _
  // Predicated region
  $region14: #{neural_network_forward.1} parent=0 // pred_check
    _
  $region15: #{neural_network_forward.1} parent=0 // pred_check_branch
    %17 = sbr.rel (0) target = $region17
  $region16: #{neural_network_forward.1} parent=0 // pred_region
    _
  $region17: #{neural_network_forward.1} parent=0 // pred_fallthru
    _
  // Predicated region
  $region18: #{neural_network_forward.1} parent=0 // pred_check
    _
  $region19: #{neural_network_forward.1} parent=0 // pred_check_branch
    %19 = sbr.rel (0) target = $region21
  $region20: #{neural_network_forward.1} parent=0 // pred_region
    _
  $region21: #{neural_network_forward.1} parent=0 // pred_fallthru
    _
  %v20 = vld [vmem:[%s0] sm:$0xff]
  %v21 = vld [vmem:[%s1] sm:$0xff]
  %v22 = vld [vmem:[%s1 + $0x8] sm:$0xff]
  %v23 = vld [vmem:[%s1 + $0x10] sm:$0xff]
  %v24 = vld [vmem:[%s1 + $0x18] sm:$0xff]
  %v25 = vld [vmem:[%s2] sm:$0x3]
  %v27 = vlaneseq
  %v28 = vshrl.u32 %v27, 7
  %v29 = vsub.s32 0, %v28
  %v30 = vrot.slane %v25, %v29
  %v31 = vlaneseq
  %v32 = vshrl.u32 %v31, 7
  %v33 = vsub.s32 1, %v32
  %v34 = vrot.slane %v25, %v33
  %vm37 = vcmask 130048
  %v39 = vsel %vm37, %v20, 0
  %41 = vmatprep.subr.mxu0 0.0
  %42 = vmatpush1.msra.mxu0 0.0
  %43 = vmatprep.subr.mxu0 0.0
  %44 = vmatpush1.msra.mxu0 0.0
  %45 = vmatprep.subr.mxu0 0.0
  %46 = vmatpush1.msra.mxu0 0.0
  %47 = vmatprep.subr.mxu0 0.0
  %48 = vmatpush1.msra.mxu0 0.0
  %49 = vmatprep.subr.mxu0 0.0
  %50 = vmatpush1.msra.mxu0 0.0
  %51 = vmatprep.subr.mxu0 0.0
  %52 = vmatpush1.msra.mxu0 0.0
  %53 = vmatprep.subr.mxu0 0.0
  %54 = vmatpush1.msra.mxu0 0.0
  %55 = vmatprep.subr.mxu0 0.0
  %56 = vmatpush1.msra.mxu0 0.0
  %57 = vmatprep.subr.mxu0 0.0
  %58 = vmatpush1.msra.mxu0 0.0
  %59 = vmatprep.subr.mxu0 0.0
  %60 = vmatpush1.msra.mxu0 0.0
  %61 = vmatprep.subr.mxu0 0.0
  %62 = vmatpush1.msra.mxu0 0.0
  %63 = vmatprep.subr.mxu0 0.0
  %64 = vmatpush1.msra.mxu0 0.0
  %65 = vmatprep.subr.mxu0 0.0
  %66 = vmatpush1.msra.mxu0 0.0
  %67 = vmatprep.subr.mxu0 0.0
  %68 = vmatpush1.msra.mxu0 0.0
  %69 = vmatprep.subr.mxu0 %v24
  %70 = vmatpush1.msra.mxu0 %v23
  %71 = vmatprep.subr.mxu0 %v22
  %72 = vmatpush1.msra.mxu0 %v21
  %73 = vmatprep.subr.mxu0 0.0
  %74 = vmatpush2.msra.mxu0 0.0
  %75 = vmatprep.subr.mxu0 0.0
  %76 = vmatpush2.msra.mxu0 0.0
  %77 = vmatprep.subr.mxu0 0.0
  %78 = vmatpush2.msra.mxu0 0.0
  %79 = vmatprep.subr.mxu0 0.0
  %80 = vmatpush2.msra.mxu0 0.0
  %81 = vmatprep.subr.mxu0 0.0
  %82 = vmatpush2.msra.mxu0 0.0
  %83 = vmatprep.subr.mxu0 0.0
  %84 = vmatpush2.msra.mxu0 0.0
  %85 = vmatprep.subr.mxu0 0.0
  %86 = vmatpush2.msra.mxu0 0.0
  %87 = vmatprep.subr.mxu0 0.0
  %88 = vmatpush2.msra.mxu0 0.0
  %89 = vmatprep.subr.mxu0 0.0
  %90 = vmatpush2.msra.mxu0 0.0
  %91 = vmatprep.subr.mxu0 0.0
  %92 = vmatpush2.msra.mxu0 0.0
  %93 = vmatprep.subr.mxu0 0.0
  %94 = vmatpush2.msra.mxu0 0.0
  %95 = vmatprep.subr.mxu0 0.0
  %96 = vmatpush2.msra.mxu0 0.0
  %97 = vmatprep.subr.mxu0 0.0
  %98 = vmatpush2.msra.mxu0 0.0
  %99 = vmatprep.subr.mxu0 0.0
  %100 = vmatpush2.msra.mxu0 0.0
  %101 = vmatprep.subr.mxu0 0.0
  %102 = vmatpush2.msra.mxu0 0.0
  %103 = vmatprep.subr.mxu0 0.0
  %104 = vmatpush2.msra.mxu0 0.0
  %105 = vmatprep.mubr.f32.mxu0 0.0
  %106 = vmatmul.mubr.f32.gmra.mxu0 %v39
  %v107 = vpop.f32.mrf.mxu0
  %v108 = vadd.f32 %v30, %v107
  %v109 = vpop.f32.mrf.mxu0
  %v110 = vadd.f32 %v34, %v109
  %111 = vdwg.mxu0
  %v112 = vmax.f32 %v108, 0.0
  %v113 = vmax.f32 %v110, 0.0
  %v114 = vld [vmem:[%s3] sm:$0xff]
  %v115 = vld [vmem:[%s3 + $0x8] sm:$0xff]
  %v116 = vld [vmem:[%s3 + $0x10] sm:$0xff]
  %v117 = vld [vmem:[%s3 + $0x18] sm:$0xff]
  %v118 = vld [vmem:[%s3 + $0x20] sm:$0xff]
  %v119 = vld [vmem:[%s3 + $0x28] sm:$0xff]
  %v120 = vld [vmem:[%s3 + $0x30] sm:$0xff]
  %v121 = vld [vmem:[%s3 + $0x38] sm:$0xff]
  %v122 = vld [vmem:[%s3 + $0x40] sm:$0xff]
  %v123 = vld [vmem:[%s3 + $0x48] sm:$0xff]
  %v124 = vld [vmem:[%s3 + $0x50] sm:$0xff]
  %v125 = vld [vmem:[%s3 + $0x58] sm:$0xff]
  %v126 = vld [vmem:[%s3 + $0x60] sm:$0xff]
  %v127 = vld [vmem:[%s3 + $0x68] sm:$0xff]
  %v128 = vld [vmem:[%s3 + $0x70] sm:$0xff]
  %v129 = vld [vmem:[%s3 + $0x78] sm:$0xff]
  %v130 = vld [vmem:[%s3 + $0x80] sm:$0xff]
  %v131 = vld [vmem:[%s3 + $0x88] sm:$0xff]
  %v132 = vld [vmem:[%s3 + $0x90] sm:$0xff]
  %v133 = vld [vmem:[%s3 + $0x98] sm:$0xff]
  %v134 = vld [vmem:[%s3 + $0xa0] sm:$0xff]
  %v135 = vld [vmem:[%s3 + $0xa8] sm:$0xff]
  %v136 = vld [vmem:[%s3 + $0xb0] sm:$0xff]
  %v137 = vld [vmem:[%s3 + $0xb8] sm:$0xff]
  %v138 = vld [vmem:[%s3 + $0xc0] sm:$0xff]
  %v139 = vld [vmem:[%s3 + $0xc8] sm:$0xff]
  %v140 = vld [vmem:[%s3 + $0xd0] sm:$0xff]
  %v141 = vld [vmem:[%s3 + $0xd8] sm:$0xff]
  %v142 = vld [vmem:[%s3 + $0xe0] sm:$0xff]
  %v143 = vld [vmem:[%s3 + $0xe8] sm:$0xff]
  %v144 = vld [vmem:[%s3 + $0xf0] sm:$0xff]
  %v145 = vld [vmem:[%s3 + $0xf8] sm:$0xff]
  %v146 = vld [vmem:[%s4] sm:$0x1]
  %v148 = vlaneseq
  %v149 = vshrl.u32 %v148, 7
  %v150 = vsub.s32 0, %v149
  %v151 = vrot.slane %v146, %v150
  %153 = vmatprep.subr.mxu0 0.0
  %154 = vmatpush1.msra.mxu0 %v129
  %155 = vmatprep.subr.mxu0 0.0
  %156 = vmatpush1.msra.mxu0 %v128
  %157 = vmatprep.subr.mxu0 0.0
  %158 = vmatpush1.msra.mxu0 %v127
  %159 = vmatprep.subr.mxu0 0.0
  %160 = vmatpush1.msra.mxu0 %v126
  %161 = vmatprep.subr.mxu0 0.0
  %162 = vmatpush1.msra.mxu0 %v125
  %163 = vmatprep.subr.mxu0 0.0
  %164 = vmatpush1.msra.mxu0 %v124
  %165 = vmatprep.subr.mxu0 0.0
  %166 = vmatpush1.msra.mxu0 %v123
  %167 = vmatprep.subr.mxu0 0.0
  %168 = vmatpush1.msra.mxu0 %v122
  %169 = vmatprep.subr.mxu0 0.0
  %170 = vmatpush1.msra.mxu0 %v121
  %171 = vmatprep.subr.mxu0 0.0
  %172 = vmatpush1.msra.mxu0 %v120
  %173 = vmatprep.subr.mxu0 0.0
  %174 = vmatpush1.msra.mxu0 %v119
  %175 = vmatprep.subr.mxu0 0.0
  %176 = vmatpush1.msra.mxu0 %v118
  %177 = vmatprep.subr.mxu0 0.0
  %178 = vmatpush1.msra.mxu0 %v117
  %179 = vmatprep.subr.mxu0 0.0
  %180 = vmatpush1.msra.mxu0 %v116
  %181 = vmatprep.subr.mxu0 0.0
  %182 = vmatpush1.msra.mxu0 %v115
  %183 = vmatprep.subr.mxu0 0.0
  %184 = vmatpush1.msra.mxu0 %v114
  %185 = vmatprep.subr.mxu0 0.0
  %186 = vmatpush2.msra.mxu0 %v145
  %187 = vmatprep.subr.mxu0 0.0
  %188 = vmatpush2.msra.mxu0 %v144
  %189 = vmatprep.subr.mxu0 0.0
  %190 = vmatpush2.msra.mxu0 %v143
  %191 = vmatprep.subr.mxu0 0.0
  %192 = vmatpush2.msra.mxu0 %v142
  %193 = vmatprep.subr.mxu0 0.0
  %194 = vmatpush2.msra.mxu0 %v141
  %195 = vmatprep.subr.mxu0 0.0
  %196 = vmatpush2.msra.mxu0 %v140
  %197 = vmatprep.subr.mxu0 0.0
  %198 = vmatpush2.msra.mxu0 %v139
  %199 = vmatprep.subr.mxu0 0.0
  %200 = vmatpush2.msra.mxu0 %v138
  %201 = vmatprep.subr.mxu0 0.0
  %202 = vmatpush2.msra.mxu0 %v137
  %203 = vmatprep.subr.mxu0 0.0
  %204 = vmatpush2.msra.mxu0 %v136
  %205 = vmatprep.subr.mxu0 0.0
  %206 = vmatpush2.msra.mxu0 %v135
  %207 = vmatprep.subr.mxu0 0.0
  %208 = vmatpush2.msra.mxu0 %v134
  %209 = vmatprep.subr.mxu0 0.0
  %210 = vmatpush2.msra.mxu0 %v133
  %211 = vmatprep.subr.mxu0 0.0
  %212 = vmatpush2.msra.mxu0 %v132
  %213 = vmatprep.subr.mxu0 0.0
  %214 = vmatpush2.msra.mxu0 %v131
  %215 = vmatprep.subr.mxu0 0.0
  %216 = vmatpush2.msra.mxu0 %v130
  %217 = vmatprep.mubr.f32.mxu0 %v113
  %218 = vmatmul.mubr.f32.gmra.mxu0 %v112
  %v219 = vpop.f32.mrf.mxu0
  %v220 = vadd.f32 %v151, %v219
  %v221 = vpop.f32.mrf.mxu0
  %222 = vdwg.mxu0
  %223 = vst [vmem:[%s5] sm:$0xff] %v220
  // Predicated region
  $region22: #{neural_network_forward.1} parent=0 // pred_check
    _
  $region23: #{neural_network_forward.1} parent=0 // pred_check_branch
    %225 = sbr.rel (0) target = $region25
  $region24: #{neural_network_forward.1} parent=0 // pred_region
    _
  $region25: #{neural_network_forward.1} parent=0 // pred_fallthru
    _
  // Predicated region
  $region26: #{neural_network_forward.1} parent=0 // pred_check
    _
  $region27: #{neural_network_forward.1} parent=0 // pred_check_branch
    %227 = sbr.rel (0) target = $region29
  $region28: #{neural_network_forward.1} parent=0 // pred_region
    _
  $region29: #{neural_network_forward.1} parent=0 // pred_fallthru
    _

</llo_original>
